<compile_context>
chip_gen: v7x
topology: tpu7x:2x2x1
jax: 0.10.0
libtpu: 0.0.40
codegen_flags: <defaults>
</compile_context>

<pallas_src>
import functools

import jax
import jax.numpy as jnp
from jax.experimental import pallas as pl
from jax.experimental.pallas import tpu as pltpu


# ----------------------------------------------------------------------------
# helpers
# ----------------------------------------------------------------------------

def _gelu(x):
    # TODO(synk): PyTorch nn.GELU default is exact erf-GELU; tanh approximation
    # used here (EUP-friendly, guaranteed Mosaic lowering), ~1e-3 numeric diff.
    return jax.nn.gelu(x, approximate=True)


def _pick_tile(dim, target, align):
    """Largest multiple of `align` <= target that evenly divides dim, else dim
    (a full-extent block is always legal)."""
    if dim <= target:
        return dim
    t = (target // align) * align
    while t >= align:
        if dim % t == 0:
            return t
        t -= align
    return dim


# ----------------------------------------------------------------------------
# kernels
# ----------------------------------------------------------------------------

def _linear_kernel(x_ref, w_ref, b_ref, o_ref, acc_ref, *, act):
    """Tiled y = x @ W + b (optional GELU). K axis is the last grid dim."""
    @pl.when(pl.program_id(2) == 0)
    def _():
        acc_ref[...] = jnp.zeros_like(acc_ref)

    acc_ref[...] += jnp.dot(x_ref[...].astype(jnp.bfloat16), w_ref[...],
                            preferred_element_type=jnp.float32)

    @pl.when(pl.program_id(2) == pl.num_programs(2) - 1)
    def _():
        y = acc_ref[...] + b_ref[...]
        if act == "gelu":
            y = _gelu(y)
        o_ref[...] = y.astype(o_ref.dtype)


def _linear_residual_kernel(x_ref, w_ref, b_ref, r_ref, o_ref, acc_ref):
    """Tiled y = x @ W + b + residual (fused residual add)."""
    @pl.when(pl.program_id(2) == 0)
    def _():
        acc_ref[...] = jnp.zeros_like(acc_ref)

    acc_ref[...] += jnp.dot(x_ref[...].astype(jnp.bfloat16), w_ref[...],
                            preferred_element_type=jnp.float32)

    @pl.when(pl.program_id(2) == pl.num_programs(2) - 1)
    def _():
        o_ref[...] = (acc_ref[...] + b_ref[...] + r_ref[...]).astype(o_ref.dtype)


def _ln_linear_kernel(x_ref, g_ref, beta_ref, w_ref, bias_ref, o_ref, *, eps, act):
    """Fused y = LayerNorm(x) @ W + b (optional GELU). Full-K blocks (K = d_model
    or FFN, small enough to keep resident) so LN stats are exact per row-tile."""
    x = x_ref[...].astype(jnp.float32)                       # (tm, K)
    mu = jnp.mean(x, axis=-1, keepdims=True)
    var = jnp.mean(jnp.square(x - mu), axis=-1, keepdims=True)
    xn = (x - mu) * jax.lax.rsqrt(var + eps)
    xn = xn * g_ref[...] + beta_ref[...]                     # f32 epilogue math
    y = jnp.dot(xn.astype(jnp.bfloat16), w_ref[...],         # bf16 MXU inputs
                preferred_element_type=jnp.float32)
    y = y + bias_ref[...]
    if act == "gelu":
        y = _gelu(y)
    o_ref[...] = y.astype(o_ref.dtype)


def _layernorm_kernel(x_ref, g_ref, b_ref, o_ref, *, eps):
    x = x_ref[...].astype(jnp.float32)
    mu = jnp.mean(x, axis=-1, keepdims=True)
    var = jnp.mean(jnp.square(x - mu), axis=-1, keepdims=True)
    y = (x - mu) * jax.lax.rsqrt(var + eps)
    o_ref[...] = (y * g_ref[...] + b_ref[...]).astype(o_ref.dtype)


def _flash_attn_kernel(q_ref, k_ref, v_ref, o_ref, m_sc, l_sc, acc_sc,
                       *, n_heads, scale):
    """Flash-style MHSA over a (B, T, 3D) fused-QKV slab.

    Blocks: q (1, tq, D), k/v (1, tkv, D) selected by column-block index map.
    Online softmax state per head kept in VMEM scratch across the KV grid axis.
    Output is a lane-dense (tq, D) store (all heads concatenated).
    """
    kvi = pl.program_id(2)

    @pl.when(kvi == 0)
    def _():
        m_sc[...] = jnp.full_like(m_sc, -jnp.inf)
        l_sc[...] = jnp.zeros_like(l_sc)
        acc_sc[...] = jnp.zeros_like(acc_sc)

    H = n_heads
    D = q_ref.shape[2]
    Dh = D // H

    q = (q_ref[0].astype(jnp.float32) * scale).astype(jnp.bfloat16)  # (tq, D)
    k = k_ref[0].astype(jnp.bfloat16)                                # (tkv, D)
    v = v_ref[0].astype(jnp.bfloat16)                                # (tkv, D)

    for h in range(H):                      # static unroll over heads
        sl = slice(h * Dh, (h + 1) * Dh)
        # scores = q_h @ k_h^T  (contract over head_dim), f32 accumulate
        s = jax.lax.dot_general(q[:, sl], k[:, sl], (((1,), (1,)), ((), ())),
                                preferred_element_type=jnp.float32)  # (tq, tkv)
        m_prev = m_sc[h]                                             # (tq, 1)
        m_new = jnp.maximum(m_prev, jnp.max(s, axis=-1, keepdims=True))
        alpha = jnp.exp(m_prev - m_new)
        p = jnp.exp(s - m_new)                                       # (tq, tkv)
        l_sc[h] = alpha * l_sc[h] + jnp.sum(p, axis=-1, keepdims=True)
        pv = jnp.dot(p.astype(jnp.bfloat16), v[:, sl],
                     preferred_element_type=jnp.float32)             # (tq, Dh)
        acc_sc[h] = alpha * acc_sc[h] + pv
        m_sc[h] = m_new

    @pl.when(kvi == pl.num_programs(2) - 1)
    def _():
        outs = []
        for h in range(H):
            inv = pl.reciprocal(l_sc[h], approx=True)                # EUP divide
            outs.append(acc_sc[h] * inv)                             # (tq, Dh)
        o_ref[0] = jnp.concatenate(outs, axis=-1).astype(o_ref.dtype)


# ----------------------------------------------------------------------------
# pallas_call wrappers
# ----------------------------------------------------------------------------

def pallas_linear(x, w, b, act=None, residual=None, tm=256, tn=512, tk=512):
    """Tiled matmul (+bias, +optional GELU / residual). W must be (K, N) bf16."""
    M, K = x.shape
    _, N = w.shape
    tm = _pick_tile(M, tm, 8)
    tn = _pick_tile(N, tn, 128)
    tk = _pick_tile(K, tk, 128)
    grid = (M // tm, N // tn, K // tk)

    b2 = b.reshape(1, N).astype(jnp.float32)
    x_spec = pl.BlockSpec((tm, tk), lambda i, j, kk: (i, kk))
    w_spec = pl.BlockSpec((tk, tn), lambda i, j, kk: (kk, j))
    b_spec = pl.BlockSpec((1, tn), lambda i, j, kk: (0, j))
    o_spec = pl.BlockSpec((tm, tn), lambda i, j, kk: (i, j))
    out_shape = jax.ShapeDtypeStruct((M, N), x.dtype)
    scratch = [pltpu.VMEM((tm, tn), jnp.float32)]
    cost = pl.CostEstimate(
        flops=2 * M * N * K,
        transcendentals=M * N if act == "gelu" else 0,
        bytes_accessed=int(M * K * x.dtype.itemsize + K * N * w.dtype.itemsize
                           + M * N * 4))
    params = pltpu.CompilerParams(
        dimension_semantics=("parallel", "parallel", "arbitrary"))

    if residual is None:
        return pl.pallas_call(
            functools.partial(_linear_kernel, act=act),
            grid=grid,
            in_specs=[x_spec, w_spec, b_spec],
            out_specs=o_spec,
            out_shape=out_shape,
            scratch_shapes=scratch,
            compiler_params=params,
            cost_estimate=cost,
        )(x, w, b2)

    r_spec = pl.BlockSpec((tm, tn), lambda i, j, kk: (i, j))
    return pl.pallas_call(
        _linear_residual_kernel,
        grid=grid,
        in_specs=[x_spec, w_spec, b_spec, r_spec],
        out_specs=o_spec,
        out_shape=out_shape,
        scratch_shapes=scratch,
        compiler_params=params,
        cost_estimate=cost,
    )(x, w, b2, residual)


def pallas_ln_linear(x, gamma, beta, w, b, act=None, eps=1e-5, tm=256, tn=512):
    """Fused LayerNorm + matmul (+bias, +optional GELU). Full K per block."""
    M, K = x.shape
    _, N = w.shape
    tm = _pick_tile(M, tm, 8)
    tn = _pick_tile(N, tn, 128)
    grid = (M // tm, N // tn)
    cost = pl.CostEstimate(
        flops=2 * M * N * K + 8 * M * K,
        transcendentals=M * N if act == "gelu" else 0,
        bytes_accessed=int(M * K * x.dtype.itemsize + K * N * w.dtype.itemsize
                           + M * N * 4))
    return pl.pallas_call(
        functools.partial(_ln_linear_kernel, eps=eps, act=act),
        grid=grid,
        in_specs=[
            pl.BlockSpec((tm, K), lambda i, j: (i, 0)),
            pl.BlockSpec((1, K), lambda i, j: (0, 0)),
            pl.BlockSpec((1, K), lambda i, j: (0, 0)),
            pl.BlockSpec((K, tn), lambda i, j: (0, j)),
            pl.BlockSpec((1, tn), lambda i, j: (0, j)),
        ],
        out_specs=pl.BlockSpec((tm, tn), lambda i, j: (i, j)),
        out_shape=jax.ShapeDtypeStruct((M, N), x.dtype),
        compiler_params=pltpu.CompilerParams(
            dimension_semantics=("parallel", "parallel")),
        cost_estimate=cost,
    )(x, gamma.reshape(1, K), beta.reshape(1, K), w, b.reshape(1, N).astype(jnp.float32))


def pallas_layernorm(x, gamma, beta, eps=1e-5, tm=256):
    M, D = x.shape
    tm = _pick_tile(M, tm, 8)
    return pl.pallas_call(
        functools.partial(_layernorm_kernel, eps=eps),
        grid=(M // tm,),
        in_specs=[
            pl.BlockSpec((tm, D), lambda i: (i, 0)),
            pl.BlockSpec((1, D), lambda i: (0, 0)),
            pl.BlockSpec((1, D), lambda i: (0, 0)),
        ],
        out_specs=pl.BlockSpec((tm, D), lambda i: (i, 0)),
        out_shape=jax.ShapeDtypeStruct((M, D), x.dtype),
        compiler_params=pltpu.CompilerParams(dimension_semantics=("parallel",)),
    )(x, gamma.reshape(1, D), beta.reshape(1, D))


def pallas_flash_attention(qkv, n_heads, scale, t_q=128, t_kv=128):
    """qkv: (B, T, 3D) fused projection output. Returns (B, T, D)."""
    B, T, threeD = qkv.shape
    D = threeD // 3
    H = n_heads
    tq = _pick_tile(T, t_q, 8)
    tkv = _pick_tile(T, t_kv, 8)
    # TODO(synk): production Whisper T=1500 is not 8-aligned; falls back to a
    # full-T block here — add tail masking for tiled T at real sizes.
    grid = (B, T // tq, T // tkv)
    q_spec = pl.BlockSpec((1, tq, D), lambda b, qi, ki: (b, qi, 0))
    k_spec = pl.BlockSpec((1, tkv, D), lambda b, qi, ki: (b, ki, 1))
    v_spec = pl.BlockSpec((1, tkv, D), lambda b, qi, ki: (b, ki, 2))
    o_spec = pl.BlockSpec((1, tq, D), lambda b, qi, ki: (b, qi, 0))
    return pl.pallas_call(
        functools.partial(_flash_attn_kernel, n_heads=H, scale=scale),
        grid=grid,
        in_specs=[q_spec, k_spec, v_spec],
        out_specs=o_spec,
        out_shape=jax.ShapeDtypeStruct((B, T, D), qkv.dtype),
        scratch_shapes=[
            pltpu.VMEM((H, tq, 1), jnp.float32),       # running max
            pltpu.VMEM((H, tq, 1), jnp.float32),       # running denom
            pltpu.VMEM((H, tq, D // H), jnp.float32),  # running output
        ],
        compiler_params=pltpu.CompilerParams(
            dimension_semantics=("parallel", "parallel", "arbitrary")),
    )(qkv, qkv, qkv)


# ----------------------------------------------------------------------------
# Encoder forward (glue in plain JAX, hot path in Pallas kernels)
# ----------------------------------------------------------------------------

def conv1d_gelu(x_btc, w_ock, bias, stride):
    """Conv1d (PyTorch weight layout (C_out, C_in, K)) via im2col + tiled Pallas matmul."""
    # TODO(synk): replace im2col for conv2 with in-kernel shifted-matmul
    # accumulation (3x less activation HBM traffic); im2col kept for simplicity.
    B, T, C_in = x_btc.shape
    C_out, _, K = w_ock.shape
    pad = 1
    xp = jnp.pad(x_btc, ((0, 0), (pad, pad), (0, 0)))
    T_out = (T + 2 * pad - K) // stride + 1
    cols = [xp[:, k:k + stride * T_out:stride, :] for k in range(K)]
    xcol = jnp.concatenate(cols, axis=-1).reshape(B * T_out, K * C_in)
    w_flat = jnp.transpose(w_ock, (2, 1, 0)).reshape(K * C_in, C_out).astype(jnp.bfloat16)
    y = pallas_linear(xcol, w_flat, bias, act="gelu")
    return y.reshape(B, T_out, C_out)


def whisper_encoder(params, input_features, n_heads):
    # input_features: (B, num_mel_bins, T_in) -- PyTorch NCT conv layout
    x = jnp.transpose(input_features, (0, 2, 1))                 # -> BTC
    x = conv1d_gelu(x, params["conv1_w"], params["conv1_b"], stride=1)
    x = conv1d_gelu(x, params["conv2_w"], params["conv2_b"], stride=2)
    B, T, D = x.shape
    x = x + params["pos"][:T][None, :, :]

    H = n_heads
    Dh = D // H
    scale = float(Dh) ** -0.5

    x2 = x.reshape(B * T, D)
    for lp in params["layers"]:
        # --- self-attention block: LN1 fused into the QKV projection ---
        res = x2
        qkv = pallas_ln_linear(x2, lp["ln1_g"], lp["ln1_b"],
                               lp["qkv_w"], lp["qkv_b"])          # (B*T, 3D)
        attn = pallas_flash_attention(qkv.reshape(B, T, 3 * D),
                                      n_heads=H, scale=scale)     # (B, T, D)
        x2 = pallas_linear(attn.reshape(B * T, D), lp["o_w"], lp["o_b"],
                           residual=res)

        # --- feed-forward block: LN2 fused into fc1 ---
        res = x2
        h = pallas_ln_linear(x2, lp["ln2_g"], lp["ln2_b"],
                             lp["fc1_w"], lp["fc1_b"], act="gelu")
        x2 = pallas_linear(h, lp["fc2_w"], lp["fc2_b"], residual=res)

    x2 = pallas_layernorm(x2, params["lnf_g"], params["lnf_b"])
    return x2.reshape(B, T, D)


# ----------------------------------------------------------------------------
# Deterministic synthetic parameters
# ----------------------------------------------------------------------------

def init_params(key, *, n_mels, d_model, n_layers, ffn, max_pos):
    keys = iter(jax.random.split(key, 16 + 16 * n_layers))

    def w(shape, scale=0.02):
        return (scale * jax.random.normal(next(keys), shape)).astype(jnp.float32)

    bf = lambda a: a.astype(jnp.bfloat16)
    ones = lambda n: jnp.ones((n,), jnp.float32)
    zeros = lambda n: jnp.zeros((n,), jnp.float32)

    params = {
        "conv1_w": w((d_model, n_mels, 3)), "conv1_b": w((d_model,)),
        "conv2_w": w((d_model, d_model, 3)), "conv2_b": w((d_model,)),
        "pos": w((max_pos, d_model)),
        "lnf_g": ones(d_model), "lnf_b": zeros(d_model),
        "layers": [],
    }
    for _ in range(n_layers):
        q_w, k_w, v_w = w((d_model, d_model)), w((d_model, d_model)), w((d_model, d_model))
        q_b, k_b, v_b = w((d_model,)), zeros(d_model), w((d_model,))  # k bias=False in HF
        params["layers"].append({
            "ln1_g": ones(d_model), "ln1_b": zeros(d_model),
            "qkv_w": bf(jnp.concatenate([q_w, k_w, v_w], axis=1)),    # (D, 3D) bf16
            "qkv_b": jnp.concatenate([q_b, k_b, v_b]),                # (3D,)
            "o_w": bf(w((d_model, d_model))), "o_b": w((d_model,)),
            "ln2_g": ones(d_model), "ln2_b": zeros(d_model),
            "fc1_w": bf(w((d_model, ffn))), "fc1_b": w((ffn,)),
            "fc2_w": bf(w((ffn, d_model))), "fc2_b": w((d_model,)),
        })
    return params


if __name__ == "__main__":
    B = 2
    N_MELS = 8
    T_IN = 16          # mel frames; after conv2 (stride 2): seq = 8
    D_MODEL = 128      # lane-aligned small width (heads split happens in-kernel)
    N_HEADS = 4
    N_LAYERS = 2
    FFN = 512
    MAX_POS = T_IN // 2

    key = jax.random.PRNGKey(0)
    pkey, xkey = jax.random.split(key)
    params = init_params(pkey, n_mels=N_MELS, d_model=D_MODEL,
                         n_layers=N_LAYERS, ffn=FFN, max_pos=MAX_POS)
    input_features = jax.random.normal(xkey, (B, N_MELS, T_IN), jnp.float32)

    out = whisper_encoder(params, input_features, n_heads=N_HEADS)
    out = jax.block_until_ready(out)

    assert out.shape == (B, T_IN // 2, D_MODEL), out.shape
    assert bool(jnp.all(jnp.isfinite(out)))
    print("KERNEL_OK")
</pallas_src>

<mosaic_0001>
module attributes {stable_mosaic.version = 11 : i64} {
  func.func @_linear_kernel(%arg0: i32, %arg1: i32, %arg2: i32, %arg3: memref<32x24xf32, #tpu.memory_space<vmem>>, %arg4: memref<24x128xbf16, #tpu.memory_space<vmem>>, %arg5: memref<1x128xf32, #tpu.memory_space<vmem>>, %arg6: memref<32x128xf32, #tpu.memory_space<vmem>>, %arg7: memref<32x128xf32, #tpu.memory_space<vmem>>) attributes {dimension_semantics = [#tpu.dimension_semantics<parallel>, #tpu.dimension_semantics<parallel>, #tpu.dimension_semantics<arbitrary>], iteration_bounds = array<i64: 1, 1, 1>, scalar_prefetch = 0 : i64, scratch_operands = 1 : i64, tpu.core_type = #tpu.core_type<tc>, window_params = [{transform_indices = @transform_0, window_bounds = array<i64: 32, 24>}, {transform_indices = @transform_1, window_bounds = array<i64: 24, 128>}, {transform_indices = @transform_2, window_bounds = array<i64: 1, 128>}, {transform_indices = @transform_3, window_bounds = array<i64: 32, 128>}]} {
    %c0_i32 = arith.constant 0 : i32
    %0 = arith.cmpi eq, %arg2, %c0_i32 : i32
    %1 = arith.extui %0 : i1 to i32
    %c0_i32_0 = arith.constant 0 : i32
    %2 = arith.cmpi ne, %1, %c0_i32_0 : i32
    scf.if %2 {
      %cst_10 = arith.constant 0.000000e+00 : f32
      %13 = vector.broadcast %cst_10 : f32 to vector<32x128xf32>
      %c0_11 = arith.constant 0 : index
      %c0_12 = arith.constant 0 : index
      %14 = vector.load %arg7[%c0_11, %c0_12] : memref<32x128xf32, #tpu.memory_space<vmem>>, vector<32x128xf32>
      tpu.vector_store %arg7[%c0_11, %c0_12], %13 {strides = array<i32>} : memref<32x128xf32, #tpu.memory_space<vmem>>, vector<32x128xf32>,
    } else {
    }
    %c0 = arith.constant 0 : index
    %c0_1 = arith.constant 0 : index
    %3 = vector.load %arg7[%c0, %c0_1] : memref<32x128xf32, #tpu.memory_space<vmem>>, vector<32x128xf32>
    %c0_2 = arith.constant 0 : index
    %c0_3 = arith.constant 0 : index
    %4 = vector.load %arg3[%c0_2, %c0_3] : memref<32x24xf32, #tpu.memory_space<vmem>>, vector<32x24xf32>
    %5 = arith.truncf %4 : vector<32x24xf32> to vector<32x24xbf16>
    %c0_4 = arith.constant 0 : index
    %c0_5 = arith.constant 0 : index
    %6 = vector.load %arg4[%c0_4, %c0_5] : memref<24x128xbf16, #tpu.memory_space<vmem>>, vector<24x128xbf16>
    %cst = arith.constant dense<0.000000e+00> : vector<32x128xf32>
    %7 = tpu.matmul %5, %6, %cst {dimension_numbers = #tpu.dot_dimension_numbers<[1], [0], [0], [1], [0, 0, 1, 1], [], []>} : vector<32x24xbf16>, vector<24x128xbf16>, vector<32x128xf32> -> vector<32x128xf32>
    %8 = arith.addf %3, %7 : vector<32x128xf32>
    %c0_6 = arith.constant 0 : index
    %c0_7 = arith.constant 0 : index
    %9 = vector.load %arg7[%c0_6, %c0_7] : memref<32x128xf32, #tpu.memory_space<vmem>>, vector<32x128xf32>
    tpu.vector_store %arg7[%c0_6, %c0_7], %8 {strides = array<i32>} : memref<32x128xf32, #tpu.memory_space<vmem>>, vector<32x128xf32>,
    %c0_i32_8 = arith.constant 0 : i32
    %10 = arith.cmpi eq, %arg2, %c0_i32_8 : i32
    %11 = arith.extui %10 : i1 to i32
    %c0_i32_9 = arith.constant 0 : i32
    %12 = arith.cmpi ne, %11, %c0_i32_9 : i32
    scf.if %12 {
      %c0_10 = arith.constant 0 : index
      %c0_11 = arith.constant 0 : index
      %13 = vector.load %arg7[%c0_10, %c0_11] : memref<32x128xf32, #tpu.memory_space<vmem>>, vector<32x128xf32>
      %c0_12 = arith.constant 0 : index
      %c0_13 = arith.constant 0 : index
      %14 = vector.load %arg5[%c0_12, %c0_13] : memref<1x128xf32, #tpu.memory_space<vmem>>, vector<1x128xf32>
      %15 = vector.broadcast %14 : vector<1x128xf32> to vector<32x128xf32>
      %16 = arith.addf %13, %15 : vector<32x128xf32>
      %17 = arith.mulf %16, %16 : vector<32x128xf32>
      %18 = arith.mulf %16, %17 : vector<32x128xf32>
      %cst_14 = arith.constant 4.471500e-02 : f32
      %19 = vector.broadcast %cst_14 : f32 to vector<32x128xf32>
      %20 = arith.mulf %19, %18 : vector<32x128xf32>
      %21 = arith.addf %16, %20 : vector<32x128xf32>
      %cst_15 = arith.constant 0.797884583 : f32
      %22 = vector.broadcast %cst_15 : f32 to vector<32x128xf32>
      %23 = arith.mulf %22, %21 : vector<32x128xf32>
      %24 = math.tanh %23 : vector<32x128xf32>
      %cst_16 = arith.constant 1.000000e+00 : f32
      %25 = vector.broadcast %cst_16 : f32 to vector<32x128xf32>
      %26 = arith.addf %25, %24 : vector<32x128xf32>
      %cst_17 = arith.constant 5.000000e-01 : f32
      %27 = vector.broadcast %cst_17 : f32 to vector<32x128xf32>
      %28 = arith.mulf %27, %26 : vector<32x128xf32>
      %29 = arith.mulf %16, %28 : vector<32x128xf32>
      %c0_18 = arith.constant 0 : index
      %c0_19 = arith.constant 0 : index
      %30 = vector.load %arg6[%c0_18, %c0_19] : memref<32x128xf32, #tpu.memory_space<vmem>>, vector<32x128xf32>
      tpu.vector_store %arg6[%c0_18, %c0_19], %29 {strides = array<i32>} : memref<32x128xf32, #tpu.memory_space<vmem>>, vector<32x128xf32>,
    } else {
    }
    return
  }
  func.func @transform_0(%arg0: i32, %arg1: i32, %arg2: i32) -> (i32, i32) {
    %c0_i32 = arith.constant 0 : i32
    return %arg0, %arg2 : i32, i32
  }
  func.func @transform_1(%arg0: i32, %arg1: i32, %arg2: i32) -> (i32, i32) {
    %c0_i32 = arith.constant 0 : i32
    return %arg2, %arg1 : i32, i32
  }
  func.func @transform_2(%arg0: i32, %arg1: i32, %arg2: i32) -> (i32, i32) {
    %c0_i32 = arith.constant 0 : i32
    %c0_i32_0 = arith.constant 0 : i32
    return %c0_i32, %arg1 : i32, i32
  }
  func.func @transform_3(%arg0: i32, %arg1: i32, %arg2: i32) -> (i32, i32) {
    %c0_i32 = arith.constant 0 : i32
    return %arg0, %arg1 : i32, i32
  }
}

</mosaic_0001>

<llo_original>
// kernel: tpu_custom_call.1
$region0: #{tpu_custom_call.1}
  #allocation0 [shape = 'u32[]', space=smem, size = 0x4, offset = 0x4, fixed_abs, tag = 'smem constant byte address 0x4 - core index']
  #allocation1 [shape = 'u32[144,128]{1,0:T(1,128)}', space=vmem, size = 0x12000, scoped, tag = 'internal scratch']
  #allocation2 [shape = 'f32[32,128]{1,0:T(8,128)}', space=vmem, size = 0x4000, scoped, tag = 'scratch operand']
  %s0 = inlined_call_operand.vmem [shape: f32[32,24], index: 0, kind: input, shape index: {}]
  %s1 = inlined_call_operand.vmem [shape: bf16[24,128], index: 1, kind: input, shape index: {}]
  %s2 = inlined_call_operand.vmem [shape: f32[1,128], index: 2, kind: input, shape index: {}]
  %s3 = inlined_call_operand.hbm [shape: f32[32,128], index: 3, kind: output, shape index: {}]
  %s4 = sld [smem:[#allocation0]]
  $region30: #{tpu_custom_call.1} parent=0
    _
  %s6 = ssub.s32 1, %s4
  %s7 = scalar_select 0, %s6, %s4
  $region1: #{tpu_custom_call.1} parent=0
    #allocation3 [shape = 'u8[16384]{0}', space=vmem, size = 0x4000, scoped, tag = 'output window, operand 0, single buffered']
    #allocation4 [shape = 's32[1]{0}', space=sflag, size = 0x4, scoped, tag = 'scoped memory for tpu_custom_call.1']
    %8 = vsyncpa [#allocation4], 0
    // Predicated region
    $region2: #{tpu_custom_call.1} parent=1 // pred_check
      _
    $region3: #{tpu_custom_call.1} parent=1 // pred_check_branch
      %10 = sbr.rel (0) target = $region5
    $region4: #{tpu_custom_call.1} parent=1 // pred_region
      _
    $region5: #{tpu_custom_call.1} parent=1 // pred_fallthru
      _
    // Predicated region
    $region6: #{tpu_custom_call.1} parent=1 // pred_check
      _
    $region7: #{tpu_custom_call.1} parent=1 // pred_check_branch
      %12 = sbr.rel (0) target = $region9
    $region8: #{tpu_custom_call.1} parent=1 // pred_region
      _
    $region9: #{tpu_custom_call.1} parent=1 // pred_fallthru
      _
    // Predicated region
    $region10: #{tpu_custom_call.1} parent=1 // pred_check
      _
    $region11: #{tpu_custom_call.1} parent=1 // pred_check_branch
      %14 = sbr.rel (0) target = $region13
    $region12: #{tpu_custom_call.1} parent=1 // pred_region
      _
    $region13: #{tpu_custom_call.1} parent=1 // pred_fallthru
      _
    %p16 = scmp.eq.s32.totalorder 0, 0
    // Predicated region
    $region14: #{tpu_custom_call.1} parent=1 // pred_check
      %p17 = pneg %p16
    $region15: #{tpu_custom_call.1} parent=1 // pred_check_branch
      %19 = sbr.rel (%p17) target = $region17
    $region16: #{tpu_custom_call.1} parent=1 // pred_region
      %20 = vst [vmem:[#allocation2] sm:$0xff] 0.0
      %21 = vst [vmem:[#allocation2 + $0x8] sm:$0xff] 0.0
      %22 = vst [vmem:[#allocation2 + $0x10] sm:$0xff] 0.0
      %23 = vst [vmem:[#allocation2 + $0x18] sm:$0xff] 0.0
    $region17: #{tpu_custom_call.1} parent=1 // pred_fallthru
      _
    %v24 = vld [vmem:[#allocation2] sm:$0xff]
    %v25 = vld [vmem:[#allocation2 + $0x8] sm:$0xff]
    %v26 = vld [vmem:[#allocation2 + $0x10] sm:$0xff]
    %v27 = vld [vmem:[#allocation2 + $0x18] sm:$0xff]
    %v28 = vld [vmem:[%s0] sm:$0xff]
    %v29 = vld [vmem:[%s0 + $0x8] sm:$0xff]
    %v30 = vld [vmem:[%s0 + $0x10] sm:$0xff]
    %v31 = vld [vmem:[%s0 + $0x18] sm:$0xff]
    %v32 = vpack.c.bf16 %v29, %v28
    %v33 = vpack.c.bf16 %v31, %v30
    %v34 = vld [vmem:[%s1] sm:$0xf]
    %v35 = vld [vmem:[%s1 + $0x4] sm:$0xf]
    %v36 = vld [vmem:[%s1 + $0x8] sm:$0xf]
    %v40 = vunpack.c.l.b16 %v34
    %v41 = vunpack.c.l.b16 %v35
    %v42 = vunpack.c.l.b16 %v36
    %v43 = vpack.c.b16 %v41, %v40
    %v44 = vpack.c.b16 %v42, %v42
    %vm46 = vcmask 195584
    %v48 = vsel %vm46, %v32, 0
    %v51 = vsel %vm46, %v33, 0
    %vm53 = vcmask 1043456
    %v55 = vsel %vm53, %v44, 0
    %57 = vmatprep.subr.bf16.mxu0 0
    %58 = vmatpush1.bf16.msra.mxu0 %v43
    %59 = vmatprep.subr.bf16.mxu0 0
    %60 = vmatpush1.bf16.msra.mxu0 %v55
    %61 = vmatprep.subr.bf16.mxu0 0
    %62 = vmatpush1.bf16.msra.mxu0 0
    %63 = vmatprep.subr.bf16.mxu0 0
    %64 = vmatpush1.bf16.msra.mxu0 0
    %65 = vmatprep.subr.bf16.mxu0 0
    %66 = vmatpush1.bf16.msra.mxu0 0
    %67 = vmatprep.subr.bf16.mxu0 0
    %68 = vmatpush1.bf16.msra.mxu0 0
    %69 = vmatprep.subr.bf16.mxu0 0
    %70 = vmatpush1.bf16.msra.mxu0 0
    %71 = vmatprep.subr.bf16.mxu0 0
    %72 = vmatpush1.bf16.msra.mxu0 0
    %73 = vmatprep.subr.bf16.mxu0 0
    %74 = vmatpush1.bf16.msra.mxu0 0
    %75 = vmatprep.subr.bf16.mxu0 0
    %76 = vmatpush1.bf16.msra.mxu0 0
    %77 = vmatprep.subr.bf16.mxu0 0
    %78 = vmatpush1.bf16.msra.mxu0 0
    %79 = vmatprep.subr.bf16.mxu0 0
    %80 = vmatpush1.bf16.msra.mxu0 0
    %81 = vmatprep.subr.bf16.mxu0 0
    %82 = vmatpush1.bf16.msra.mxu0 0
    %83 = vmatprep.subr.bf16.mxu0 0
    %84 = vmatpush1.bf16.msra.mxu0 0
    %85 = vmatprep.subr.bf16.mxu0 0
    %86 = vmatpush1.bf16.msra.mxu0 0
    %87 = vmatprep.subr.bf16.mxu0 0
    %88 = vmatpush1.bf16.msra.mxu0 0
    %89 = vmatprep.mubr.bf16.mxu0 0
    %90 = vmatmul.mubr.bf16.gmra.mrb[0].mxu0 %v48
    %v91 = vpop.f32.mrb[0].mxu0
    %v92 = vadd.f32 0.0, %v91
    %v93 = vpop.f32.mrb[0].mxu0
    %v94 = vpop.f32.mrb[0].mxu0
    %v95 = vadd.f32 0.0, %v94
    %v96 = vpop.f32.mrb[0].mxu0
    %97 = vmatprep.mubr.bf16.mxu0 0
    %98 = vmatmul.mubr.bf16.gmra.mrb[0].mxu0 %v51
    %v99 = vpop.f32.mrb[0].mxu0
    %v100 = vadd.f32 0.0, %v99
    %v101 = vpop.f32.mrb[0].mxu0
    %v102 = vpop.f32.mrb[0].mxu0
    %v103 = vadd.f32 0.0, %v102
    %v104 = vpop.f32.mrb[0].mxu0
    %105 = vdwg.mxu0
    %v106 = vadd.f32 %v24, %v92
    %v107 = vadd.f32 %v25, %v95
    %v108 = vadd.f32 %v26, %v100
    %v109 = vadd.f32 %v27, %v103
    %110 = vst [vmem:[#allocation2] sm:$0xff] %v106
    %111 = vst [vmem:[#allocation2 + $0x8] sm:$0xff] %v107
    %112 = vst [vmem:[#allocation2 + $0x10] sm:$0xff] %v108
    %113 = vst [vmem:[#allocation2 + $0x18] sm:$0xff] %v109
    // Predicated region
    $region18: #{tpu_custom_call.1} parent=1 // pred_check
      %p114 = pneg %p16
    $region19: #{tpu_custom_call.1} parent=1 // pred_check_branch
      %116 = sbr.rel (%p114) target = $region21
    $region20: #{tpu_custom_call.1} parent=1 // pred_region
      %v117 = vld [vmem:[#allocation2] sm:$0xff]
      %v118 = vld [vmem:[#allocation2 + $0x8] sm:$0xff]
      %v119 = vld [vmem:[#allocation2 + $0x10] sm:$0xff]
      %v120 = vld [vmem:[#allocation2 + $0x18] sm:$0xff]
      %v121 = vld [vmem:[%s2] sm:$0x1]
      %v123 = vlaneseq
      %v124 = vshrl.u32 %v123, 7
      %v125 = vsub.s32 0, %v124
      %v126 = vrot.slane %v121, %v125
      %v128 = vadd.f32 %v117, %v126
      %v129 = vadd.f32 %v118, %v126
      %v130 = vadd.f32 %v119, %v126
      %v131 = vadd.f32 %v120, %v126
      %v132 = vmul.f32 %v128, %v128
      %v133 = vmul.f32 %v129, %v129
      %v134 = vmul.f32 %v130, %v130
      %v135 = vmul.f32 %v131, %v131
      %v136 = vmul.f32 %v128, %v132
      %v137 = vmul.f32 %v129, %v133
      %v138 = vmul.f32 %v130, %v134
      %v139 = vmul.f32 %v131, %v135
      %v140 = vmul.f32 %v136, 0.044715
      %v141 = vmul.f32 %v137, 0.044715
      %v142 = vmul.f32 %v138, 0.044715
      %v143 = vmul.f32 %v139, 0.044715
      %v144 = vadd.f32 %v128, %v140
      %v145 = vadd.f32 %v129, %v141
      %v146 = vadd.f32 %v130, %v142
      %v147 = vadd.f32 %v131, %v143
      %v148 = vmul.f32 %v144, 0.7978846
      %v149 = vmul.f32 %v145, 0.7978846
      %v150 = vmul.f32 %v146, 0.7978846
      %v151 = vmul.f32 %v147, 0.7978846
      %v152 = vtanh.pop %v148
      %v153 = vtanh.pop %v149
      %v154 = vtanh.pop %v150
      %v155 = vtanh.pop %v151
      %v156 = vadd.f32 %v152, 1.0
      %v157 = vadd.f32 %v153, 1.0
      %v158 = vadd.f32 %v154, 1.0
      %v159 = vadd.f32 %v155, 1.0
      %v160 = vmul.f32 %v156, 0.5
      %v161 = vmul.f32 %v157, 0.5
      %v162 = vmul.f32 %v158, 0.5
      %v163 = vmul.f32 %v159, 0.5
      %v164 = vmul.f32 %v128, %v160
      %v165 = vmul.f32 %v129, %v161
      %v166 = vmul.f32 %v130, %v162
      %v167 = vmul.f32 %v131, %v163
      %168 = vst [vmem:[#allocation3] sm:$0xff] %v164
      %169 = vst [vmem:[#allocation3 + $0x8] sm:$0xff] %v165
      %170 = vst [vmem:[#allocation3 + $0x10] sm:$0xff] %v166
      %171 = vst [vmem:[#allocation3 + $0x18] sm:$0xff] %v167
    $region21: #{tpu_custom_call.1} parent=1 // pred_fallthru
      _
    // Predicated region
    $region22: #{tpu_custom_call.1} parent=1 // pred_check
      _
    $region23: #{tpu_custom_call.1} parent=1 // pred_check_branch
      %173 = sbr.rel (0) target = $region25
    $region24: #{tpu_custom_call.1} parent=1 // pred_region
      %s175 = ssub.s32 512, 512
      %176 = vsyncadd [#allocation4], %s175
      %s177 = sshll.u32 [#allocation3], 4
      %s178 = int_to_ptr.vmem [resolvable:$true] %s177
      %183 = dma.vmem_to_hbm [thread:$0]  %s178, 512, %s3, [#allocation4], 128, 128, 8
    $region25: #{tpu_custom_call.1} parent=1 // pred_fallthru
      _
    // Predicated region
    $region26: #{tpu_custom_call.1} parent=1 // pred_check
      _
    $region27: #{tpu_custom_call.1} parent=1 // pred_check_branch
      %185 = sbr.rel (0) target = $region29
    $region28: #{tpu_custom_call.1} parent=1 // pred_region
      %186 = dma.done [#allocation4], 512
    $region29: #{tpu_custom_call.1} parent=1 // pred_fallthru
      _
    %187 = vsyncpa [#allocation4], 1

</llo_original>
